<compile_context>
chip_gen: v7x
topology: tpu7x:2x2x1
jax: 0.10.0
libtpu: 0.0.40
codegen_flags: <defaults>
</compile_context>

<pallas_src>
import functools

import jax
import jax.numpy as jnp
from jax.experimental import pallas as pl
from jax.experimental.pallas import tpu as pltpu


def _pick_tile(dim, candidates=(512, 256, 128)):
    """Largest candidate tile that evenly divides `dim`; else the full extent."""
    for c in candidates:
        if dim >= c and dim % c == 0:
            return c
    return dim  # full array extent is always a legal block size


def _vmem_limit_bytes(block_bytes, scratch_bytes=0):
    # 2x for double-buffered pipelining of each BlockSpec'd operand, plus scratch and
    # headroom; clamp to [16 MiB, 64 MiB] so the limit is valid on v5e/v6e/v7x.
    need = 2 * block_bytes + scratch_bytes + (4 << 20)
    return int(min(64 << 20, max(16 << 20, 2 * need)))


# ----------------------------------------------------------------------------------
# Pass 1: per-feature mean and inv_std over the full batch.
# ----------------------------------------------------------------------------------
def _bn_stats_kernel(x_ref, mean_ref, istd_ref, *, n_total, eps):
    nb = pl.program_id(1)  # batch-tile index (reduction axis)

    @pl.when(nb == 0)
    def _():
        mean_ref[...] = jnp.zeros_like(mean_ref)
        istd_ref[...] = jnp.zeros_like(istd_ref)

    x = x_ref[...].astype(jnp.float32)                       # (tb, td)
    ones_row = jnp.ones((1, x.shape[0]), dtype=jnp.float32)  # (1, tb)
    # Batch-axis reductions on the MXU, single fused pass (sum and sum of squares).
    mean_ref[...] += jnp.dot(ones_row, x, preferred_element_type=jnp.float32)
    istd_ref[...] += jnp.dot(ones_row, x * x, preferred_element_type=jnp.float32)

    @pl.when(nb == pl.num_programs(1) - 1)
    def _():
        inv_n = 1.0 / n_total
        mean = mean_ref[...] * inv_n
        # Single-pass biased variance E[x^2] - mean^2, accumulated in f32.
        var = jnp.maximum(istd_ref[...] * inv_n - mean * mean, 0.0)
        mean_ref[...] = mean
        istd_ref[...] = jax.lax.rsqrt(var + eps)


# ----------------------------------------------------------------------------------
# Pass 2: out = ((x - mean) * inv_std) @ gamma + beta, tiled MXU matmul.
# ----------------------------------------------------------------------------------
def _bn_matmul_kernel(x_ref, mean_ref, istd_ref, gamma_ref, beta_ref, o_ref,
                      acc_ref, *, matmul_dtype):
    k = pl.program_id(2)  # contraction-tile index

    @pl.when(k == 0)
    def _():
        acc_ref[...] = jnp.zeros_like(acc_ref)

    x = x_ref[...].astype(jnp.float32)                 # (tm, tk)
    x_hat = (x - mean_ref[...]) * istd_ref[...]        # fused, per-tile only
    acc_ref[...] += jnp.dot(x_hat.astype(matmul_dtype),
                            gamma_ref[...].astype(matmul_dtype),
                            preferred_element_type=jnp.float32)

    @pl.when(k == pl.num_programs(2) - 1)
    def _():
        o_ref[...] = (acc_ref[...] + beta_ref[...].astype(jnp.float32)
                      ).astype(o_ref.dtype)


def custom_batchnorm_forward(x, gamma, beta, eps=1e-5, matmul_dtype=jnp.float32):
    """Pallas TPU implementation of CustomBatchNormAutograd.forward.

    Args:
      x:            (n_batch, n_neurons) float array
      gamma:        (n_neurons, n_neurons) float array (module init: identity)
      beta:         (n_neurons,) float array (module init: zeros)
      eps:          stability constant added to the variance
      matmul_dtype: dtype fed to the MXU for x_hat @ gamma (jnp.bfloat16 doubles
                    MXU throughput; default f32 matches PyTorch numerics exactly)
    Returns:
      (n_batch, n_neurons) array, same dtype as x.
    """
    if x.ndim != 2 or x.shape[1] != gamma.shape[0]:
        raise Exception(
            "shape of input does not correspond with the number of neurons")

    n_batch, n_neurons = x.shape
    isz = lambda a: jnp.dtype(a.dtype).itemsize

    # ---------------- pass 1: statistics ----------------
    tb = _pick_tile(n_batch)
    td = _pick_tile(n_neurons)
    stats_block_bytes = tb * td * isz(x) + 2 * td * 4
    mean, inv_std = pl.pallas_call(
        functools.partial(_bn_stats_kernel, n_total=float(n_batch), eps=float(eps)),
        out_shape=(jax.ShapeDtypeStruct((1, n_neurons), jnp.float32),
                   jax.ShapeDtypeStruct((1, n_neurons), jnp.float32)),
        grid_spec=pltpu.PrefetchScalarGridSpec(
            num_scalar_prefetch=0,
            grid=(n_neurons // td, n_batch // tb),
            in_specs=[pl.BlockSpec((tb, td), lambda d, n: (n, d))],
            out_specs=[pl.BlockSpec((1, td), lambda d, n: (0, d)),
                       pl.BlockSpec((1, td), lambda d, n: (0, d))],
        ),
        compiler_params=pltpu.CompilerParams(
            dimension_semantics=("parallel", "arbitrary"),
            vmem_limit_bytes=_vmem_limit_bytes(stats_block_bytes)),
    )(x)

    # ---------------- pass 2: normalize + matmul ----------------
    tm = _pick_tile(n_batch)
    tn = _pick_tile(n_neurons)
    tk = _pick_tile(n_neurons)
    beta2d = beta.reshape(1, n_neurons)
    mm_block_bytes = (tm * tk * isz(x) + 2 * tk * 4
                      + tk * tn * isz(gamma) + tn * isz(beta2d)
                      + tm * tn * isz(x))
    return pl.pallas_call(
        functools.partial(_bn_matmul_kernel, matmul_dtype=matmul_dtype),
        out_shape=jax.ShapeDtypeStruct((n_batch, n_neurons), x.dtype),
        grid_spec=pltpu.PrefetchScalarGridSpec(
            num_scalar_prefetch=0,
            grid=(n_batch // tm, n_neurons // tn, n_neurons // tk),
            in_specs=[
                pl.BlockSpec((tm, tk), lambda i, j, k: (i, k)),   # x
                pl.BlockSpec((1, tk), lambda i, j, k: (0, k)),    # mean
                pl.BlockSpec((1, tk), lambda i, j, k: (0, k)),    # inv_std
                pl.BlockSpec((tk, tn), lambda i, j, k: (k, j)),   # gamma
                pl.BlockSpec((1, tn), lambda i, j, k: (0, j)),    # beta
            ],
            out_specs=pl.BlockSpec((tm, tn), lambda i, j, k: (i, j)),
            scratch_shapes=[pltpu.VMEM((tm, tn), jnp.float32)],
        ),
        compiler_params=pltpu.CompilerParams(
            dimension_semantics=("parallel", "parallel", "arbitrary"),
            vmem_limit_bytes=_vmem_limit_bytes(mm_block_bytes, tm * tn * 4)),
    )(x, mean, inv_std, gamma, beta2d)


def _reference_forward(x, gamma, beta, eps=1e-5):
    # Pure-JAX reference mirroring the PyTorch module exactly.
    mean = jnp.mean(x, axis=0)
    var = jnp.var(x, axis=0)  # biased (unbiased=False)
    x_hat = (x - mean) / jnp.sqrt(var + eps)
    return x_hat @ gamma + beta


if __name__ == "__main__":
    # Small but lane-dense shapes (multiples of 8 sublanes x 128 lanes) so stores are
    # unmasked and the MXU tiles are reasonably filled.
    n_batch, n_neurons = 128, 256
    eps = 1e-5

    key = jax.random.PRNGKey(0)
    kx, kg, kb = jax.random.split(key, 3)
    x = jax.random.normal(kx, (n_batch, n_neurons), dtype=jnp.float32)

    # Case 1: deterministic parameter init exactly as the module's __init__.
    beta0 = jnp.zeros((n_neurons,), dtype=jnp.float32)
    gamma0 = jnp.eye(n_neurons, dtype=jnp.float32)
    out0 = jax.block_until_ready(custom_batchnorm_forward(x, gamma0, beta0, eps=eps))
    ref0 = _reference_forward(x, gamma0, beta0, eps=eps)
    assert out0.shape == (n_batch, n_neurons)
    assert jnp.allclose(out0, ref0, atol=1e-4, rtol=1e-4), "mismatch (init params)"

    # Case 2: non-trivial (trained-like) gamma / beta exercises the full matmul path.
    gamma1 = gamma0 + 0.05 * jax.random.normal(
        kg, (n_neurons, n_neurons), dtype=jnp.float32)
    beta1 = 0.1 * jax.random.normal(kb, (n_neurons,), dtype=jnp.float32)
    out1 = jax.block_until_ready(custom_batchnorm_forward(x, gamma1, beta1, eps=eps))
    ref1 = _reference_forward(x, gamma1, beta1, eps=eps)
    assert jnp.allclose(out1, ref1, atol=1e-4, rtol=1e-4), "mismatch (random params)"

    print("KERNEL_OK")
</pallas_src>

<mosaic_0001>
module attributes {stable_mosaic.version = 11 : i64} {
  func.func @_bn_stats_kernel(%arg0: i32, %arg1: i32, %arg2: memref<128x256xf32, #tpu.memory_space<vmem>>, %arg3: memref<1x256xf32, #tpu.memory_space<vmem>>, %arg4: memref<1x256xf32, #tpu.memory_space<vmem>>) attributes {dimension_semantics = [#tpu.dimension_semantics<parallel>, #tpu.dimension_semantics<arbitrary>], iteration_bounds = array<i64: 1, 1>, scalar_prefetch = 0 : i64, scratch_operands = 0 : i64, tpu.core_type = #tpu.core_type<tc>, window_params = [{transform_indices = @transform_0, window_bounds = array<i64: 128, 256>}, {transform_indices = @transform_1, window_bounds = array<i64: 1, 256>}, {transform_indices = @transform_2, window_bounds = array<i64: 1, 256>}]} {
    %c0_i32 = arith.constant 0 : i32
    %0 = arith.cmpi eq, %arg1, %c0_i32 : i32
    %1 = arith.extui %0 : i1 to i32
    %c0_i32_0 = arith.constant 0 : i32
    %2 = arith.cmpi ne, %1, %c0_i32_0 : i32
    scf.if %2 {
      %cst_14 = arith.constant 0.000000e+00 : f32
      %17 = vector.broadcast %cst_14 : f32 to vector<1x256xf32>
      %c0_15 = arith.constant 0 : index
      %c0_16 = arith.constant 0 : index
      %18 = vector.load %arg3[%c0_15, %c0_16] : memref<1x256xf32, #tpu.memory_space<vmem>>, vector<1x256xf32>
      tpu.vector_store %arg3[%c0_15, %c0_16], %17 {strides = array<i32>} : memref<1x256xf32, #tpu.memory_space<vmem>>, vector<1x256xf32>,
      %cst_17 = arith.constant 0.000000e+00 : f32
      %19 = vector.broadcast %cst_17 : f32 to vector<1x256xf32>
      %c0_18 = arith.constant 0 : index
      %c0_19 = arith.constant 0 : index
      %20 = vector.load %arg4[%c0_18, %c0_19] : memref<1x256xf32, #tpu.memory_space<vmem>>, vector<1x256xf32>
      tpu.vector_store %arg4[%c0_18, %c0_19], %19 {strides = array<i32>} : memref<1x256xf32, #tpu.memory_space<vmem>>, vector<1x256xf32>,
    } else {
    }
    %c0 = arith.constant 0 : index
    %c0_1 = arith.constant 0 : index
    %3 = vector.load %arg2[%c0, %c0_1] : memref<128x256xf32, #tpu.memory_space<vmem>>, vector<128x256xf32>
    %cst = arith.constant 1.000000e+00 : f32
    %4 = vector.broadcast %cst : f32 to vector<1x128xf32>
    %c0_2 = arith.constant 0 : index
    %c0_3 = arith.constant 0 : index
    %5 = vector.load %arg3[%c0_2, %c0_3] : memref<1x256xf32, #tpu.memory_space<vmem>>, vector<1x256xf32>
    %cst_4 = arith.constant dense<0.000000e+00> : vector<1x256xf32>
    %6 = tpu.matmul %4, %3, %cst_4 {dimension_numbers = #tpu.dot_dimension_numbers<[1], [0], [0], [1], [0, 0, 1, 1], [], []>} : vector<1x128xf32>, vector<128x256xf32>, vector<1x256xf32> -> vector<1x256xf32>
    %7 = arith.addf %5, %6 : vector<1x256xf32>
    %c0_5 = arith.constant 0 : index
    %c0_6 = arith.constant 0 : index
    %8 = vector.load %arg3[%c0_5, %c0_6] : memref<1x256xf32, #tpu.memory_space<vmem>>, vector<1x256xf32>
    tpu.vector_store %arg3[%c0_5, %c0_6], %7 {strides = array<i32>} : memref<1x256xf32, #tpu.memory_space<vmem>>, vector<1x256xf32>,
    %c0_7 = arith.constant 0 : index
    %c0_8 = arith.constant 0 : index
    %9 = vector.load %arg4[%c0_7, %c0_8] : memref<1x256xf32, #tpu.memory_space<vmem>>, vector<1x256xf32>
    %10 = arith.mulf %3, %3 : vector<128x256xf32>
    %cst_9 = arith.constant dense<0.000000e+00> : vector<1x256xf32>
    %11 = tpu.matmul %4, %10, %cst_9 {dimension_numbers = #tpu.dot_dimension_numbers<[1], [0], [0], [1], [0, 0, 1, 1], [], []>} : vector<1x128xf32>, vector<128x256xf32>, vector<1x256xf32> -> vector<1x256xf32>
    %12 = arith.addf %9, %11 : vector<1x256xf32>
    %c0_10 = arith.constant 0 : index
    %c0_11 = arith.constant 0 : index
    %13 = vector.load %arg4[%c0_10, %c0_11] : memref<1x256xf32, #tpu.memory_space<vmem>>, vector<1x256xf32>
    tpu.vector_store %arg4[%c0_10, %c0_11], %12 {strides = array<i32>} : memref<1x256xf32, #tpu.memory_space<vmem>>, vector<1x256xf32>,
    %c0_i32_12 = arith.constant 0 : i32
    %14 = arith.cmpi eq, %arg1, %c0_i32_12 : i32
    %15 = arith.extui %14 : i1 to i32
    %c0_i32_13 = arith.constant 0 : i32
    %16 = arith.cmpi ne, %15, %c0_i32_13 : i32
    scf.if %16 {
      %c0_14 = arith.constant 0 : index
      %c0_15 = arith.constant 0 : index
      %17 = vector.load %arg3[%c0_14, %c0_15] : memref<1x256xf32, #tpu.memory_space<vmem>>, vector<1x256xf32>
      %cst_16 = arith.constant 7.812500e-03 : f32
      %18 = vector.broadcast %cst_16 : f32 to vector<1x256xf32>
      %19 = arith.mulf %17, %18 : vector<1x256xf32>
      %c0_17 = arith.constant 0 : index
      %c0_18 = arith.constant 0 : index
      %20 = vector.load %arg4[%c0_17, %c0_18] : memref<1x256xf32, #tpu.memory_space<vmem>>, vector<1x256xf32>
      %cst_19 = arith.constant 7.812500e-03 : f32
      %21 = vector.broadcast %cst_19 : f32 to vector<1x256xf32>
      %22 = arith.mulf %20, %21 : vector<1x256xf32>
      %23 = arith.mulf %19, %19 : vector<1x256xf32>
      %24 = arith.subf %22, %23 : vector<1x256xf32>
      %cst_20 = arith.constant 0.000000e+00 : f32
      %25 = vector.broadcast %cst_20 : f32 to vector<1x256xf32>
      %26 = arith.maximumf %24, %25 : vector<1x256xf32>
      %c0_21 = arith.constant 0 : index
      %c0_22 = arith.constant 0 : index
      %27 = vector.load %arg3[%c0_21, %c0_22] : memref<1x256xf32, #tpu.memory_space<vmem>>, vector<1x256xf32>
      tpu.vector_store %arg3[%c0_21, %c0_22], %19 {strides = array<i32>} : memref<1x256xf32, #tpu.memory_space<vmem>>, vector<1x256xf32>,
      %cst_23 = arith.constant 9.99999974E-6 : f32
      %28 = vector.broadcast %cst_23 : f32 to vector<1x256xf32>
      %29 = arith.addf %26, %28 : vector<1x256xf32>
      %30 = math.rsqrt %29 : vector<1x256xf32>
      %c0_24 = arith.constant 0 : index
      %c0_25 = arith.constant 0 : index
      %31 = vector.load %arg4[%c0_24, %c0_25] : memref<1x256xf32, #tpu.memory_space<vmem>>, vector<1x256xf32>
      tpu.vector_store %arg4[%c0_24, %c0_25], %30 {strides = array<i32>} : memref<1x256xf32, #tpu.memory_space<vmem>>, vector<1x256xf32>,
    } else {
    }
    return
  }
  func.func @transform_0(%arg0: i32, %arg1: i32) -> (i32, i32) {
    %c0_i32 = arith.constant 0 : i32
    return %arg1, %arg0 : i32, i32
  }
  func.func @transform_1(%arg0: i32, %arg1: i32) -> (i32, i32) {
    %c0_i32 = arith.constant 0 : i32
    %c0_i32_0 = arith.constant 0 : i32
    return %c0_i32, %arg0 : i32, i32
  }
  func.func @transform_2(%arg0: i32, %arg1: i32) -> (i32, i32) {
    %c0_i32 = arith.constant 0 : i32
    %c0_i32_0 = arith.constant 0 : i32
    return %c0_i32, %arg0 : i32, i32
  }
}

</mosaic_0001>

<llo_original>
// kernel: tpu_custom_call.1
$region0: #{tpu_custom_call.1}
  #allocation0 [shape = 'u32[]', space=smem, size = 0x4, offset = 0x4, fixed_abs, tag = 'smem constant byte address 0x4 - core index']
  #allocation1 [shape = 'u32[144,128]{1,0:T(1,128)}', space=vmem, size = 0x12000, scoped, tag = 'internal scratch']
  %s0 = inlined_call_operand.hbm [shape: f32[128,256], index: 0, kind: input, shape index: {}]
  %s1 = inlined_call_operand.hbm [shape: f32[1,256], index: 1, kind: output, shape index: {0}]
  %s2 = inlined_call_operand.hbm [shape: f32[1,256], index: 2, kind: output, shape index: {1}]
  %3 = xla_tuple %s1, %s2
  %s4 = sld [smem:[#allocation0]]
  $region34: #{tpu_custom_call.1} parent=0
    _
  %s6 = ssub.s32 1, %s4
  %s7 = scalar_select 0, %s6, %s4
  $region1: #{tpu_custom_call.1} parent=0
    #allocation2 [shape = 'u8[131072]{0}', space=vmem, size = 0x20000, scoped, tag = 'input window, operand 0, single buffered']
    #allocation3 [shape = 's32[1]{0}', space=sflag, size = 0x4, scoped, tag = 'scoped memory for tpu_custom_call.1']
    #allocation4 [shape = 's32[1]{0}', space=sflag, size = 0x4, scoped, tag = 'scoped memory for tpu_custom_call.1']
    #allocation5 [shape = 'u8[1024]{0}', space=vmem, size = 0x400, scoped, tag = 'output window, operand 0, single buffered']
    #allocation6 [shape = 'u8[1024]{0}', space=vmem, size = 0x400, scoped, tag = 'output window, operand 1, single buffered']
    #allocation7 [shape = 's32[1]{0}', space=sflag, size = 0x4, scoped, tag = 'scoped memory for tpu_custom_call.1']
    %8 = vsyncpa [#allocation3], 0
    %9 = vsyncpa [#allocation4], 0
    %10 = vsyncpa [#allocation7], 0
    // Predicated region
    $region2: #{tpu_custom_call.1} parent=1 // pred_check
      _
    $region3: #{tpu_custom_call.1} parent=1 // pred_check_branch
      %12 = sbr.rel (0) target = $region5
    $region4: #{tpu_custom_call.1} parent=1 // pred_region
      %s14 = ssub.s32 4096, 4096
      %15 = vsyncadd [#allocation3], %s14
      %s16 = sshll.u32 [#allocation2], 4
      %s17 = int_to_ptr.vmem [resolvable:$true] %s16
      %22 = dma.hbm_to_vmem [thread:$0]  %s0, 4096, %s17, [#allocation3], 256, 256, 16
    $region5: #{tpu_custom_call.1} parent=1 // pred_fallthru
      _
    // Predicated region
    $region6: #{tpu_custom_call.1} parent=1 // pred_check
      _
    $region7: #{tpu_custom_call.1} parent=1 // pred_check_branch
      %24 = sbr.rel (0) target = $region9
    $region8: #{tpu_custom_call.1} parent=1 // pred_region
      %25 = dma.done [#allocation3], 4096
    $region9: #{tpu_custom_call.1} parent=1 // pred_fallthru
      _
    %p26 = scmp.eq.s32.totalorder 0, 0
    // Predicated region
    $region10: #{tpu_custom_call.1} parent=1 // pred_check
      %p27 = pneg %p26
    $region11: #{tpu_custom_call.1} parent=1 // pred_check_branch
      %29 = sbr.rel (%p27) target = $region13
    $region12: #{tpu_custom_call.1} parent=1 // pred_region
      %v30 = vlaneseq
      %vm31 = vcmp.ge.s32.totalorder %v30, 0
      %vm32 = vcmp.lt.s32.totalorder %v30, 256
      %vm33 = vmand %vm31, %vm32
      %34 = vst.msk [vmem:[#allocation5] sm:$0x3] %vm33, 0.0
      %35 = vst.msk [vmem:[#allocation6] sm:$0x3] %vm33, 0.0
    $region13: #{tpu_custom_call.1} parent=1 // pred_fallthru
      _
    %v36 = vld [vmem:[#allocation2] sm:$0xff]
    %v37 = vld [vmem:[#allocation2 + $0x8] sm:$0xff]
    %v38 = vld [vmem:[#allocation2 + $0x10] sm:$0xff]
    %v39 = vld [vmem:[#allocation2 + $0x18] sm:$0xff]
    %v40 = vld [vmem:[#allocation2 + $0x20] sm:$0xff]
    %v41 = vld [vmem:[#allocation2 + $0x28] sm:$0xff]
    %v42 = vld [vmem:[#allocation2 + $0x30] sm:$0xff]
    %v43 = vld [vmem:[#allocation2 + $0x38] sm:$0xff]
    %v44 = vld [vmem:[#allocation2 + $0x40] sm:$0xff]
    %v45 = vld [vmem:[#allocation2 + $0x48] sm:$0xff]
    %v46 = vld [vmem:[#allocation2 + $0x50] sm:$0xff]
    %v47 = vld [vmem:[#allocation2 + $0x58] sm:$0xff]
    %v48 = vld [vmem:[#allocation2 + $0x60] sm:$0xff]
    %v49 = vld [vmem:[#allocation2 + $0x68] sm:$0xff]
    %v50 = vld [vmem:[#allocation2 + $0x70] sm:$0xff]
    %v51 = vld [vmem:[#allocation2 + $0x78] sm:$0xff]
    %v52 = vld [vmem:[#allocation2 + $0x80] sm:$0xff]
    %v53 = vld [vmem:[#allocation2 + $0x88] sm:$0xff]
    %v54 = vld [vmem:[#allocation2 + $0x90] sm:$0xff]
    %v55 = vld [vmem:[#allocation2 + $0x98] sm:$0xff]
    %v56 = vld [vmem:[#allocation2 + $0xa0] sm:$0xff]
    %v57 = vld [vmem:[#allocation2 + $0xa8] sm:$0xff]
    %v58 = vld [vmem:[#allocation2 + $0xb0] sm:$0xff]
    %v59 = vld [vmem:[#allocation2 + $0xb8] sm:$0xff]
    %v60 = vld [vmem:[#allocation2 + $0xc0] sm:$0xff]
    %v61 = vld [vmem:[#allocation2 + $0xc8] sm:$0xff]
    %v62 = vld [vmem:[#allocation2 + $0xd0] sm:$0xff]
    %v63 = vld [vmem:[#allocation2 + $0xd8] sm:$0xff]
    %v64 = vld [vmem:[#allocation2 + $0xe0] sm:$0xff]
    %v65 = vld [vmem:[#allocation2 + $0xe8] sm:$0xff]
    %v66 = vld [vmem:[#allocation2 + $0xf0] sm:$0xff]
    %v67 = vld [vmem:[#allocation2 + $0xf8] sm:$0xff]
    %v68 = vld [vmem:[#allocation5] sm:$0x3]
    %69 = vmatprep.subr.mxu0 %v37
    %70 = vmatpush1.msra.mxu0 %v36
    %71 = vmatprep.subr.mxu0 %v39
    %72 = vmatpush1.msra.mxu0 %v38
    %73 = vmatprep.subr.mxu0 %v41
    %74 = vmatpush1.msra.mxu0 %v40
    %75 = vmatprep.subr.mxu0 %v43
    %76 = vmatpush1.msra.mxu0 %v42
    %77 = vmatprep.subr.mxu0 %v45
    %78 = vmatpush1.msra.mxu0 %v44
    %79 = vmatprep.subr.mxu0 %v47
    %80 = vmatpush1.msra.mxu0 %v46
    %81 = vmatprep.subr.mxu0 %v49
    %82 = vmatpush1.msra.mxu0 %v48
    %83 = vmatprep.subr.mxu0 %v51
    %84 = vmatpush1.msra.mxu0 %v50
    %85 = vmatprep.subr.mxu0 %v53
    %86 = vmatpush1.msra.mxu0 %v52
    %87 = vmatprep.subr.mxu0 %v55
    %88 = vmatpush1.msra.mxu0 %v54
    %89 = vmatprep.subr.mxu0 %v57
    %90 = vmatpush1.msra.mxu0 %v56
    %91 = vmatprep.subr.mxu0 %v59
    %92 = vmatpush1.msra.mxu0 %v58
    %93 = vmatprep.subr.mxu0 %v61
    %94 = vmatpush1.msra.mxu0 %v60
    %95 = vmatprep.subr.mxu0 %v63
    %96 = vmatpush1.msra.mxu0 %v62
    %97 = vmatprep.subr.mxu0 %v65
    %98 = vmatpush1.msra.mxu0 %v64
    %99 = vmatprep.subr.mxu0 %v67
    %100 = vmatpush1.msra.mxu0 %v66
    %101 = vmatprep.subr.mxu0 0.0
    %102 = vmatpush1.msra.mxu0 0.0
    %103 = vmatprep.subr.mxu0 0.0
    %104 = vmatpush1.msra.mxu0 0.0
    %105 = vmatprep.subr.mxu0 0.0
    %106 = vmatpush1.msra.mxu0 0.0
    %107 = vmatprep.subr.mxu0 0.0
    %108 = vmatpush1.msra.mxu0 0.0
    %109 = vmatprep.subr.mxu0 0.0
    %110 = vmatpush1.msra.mxu0 0.0
    %111 = vmatprep.subr.mxu0 0.0
    %112 = vmatpush1.msra.mxu0 0.0
    %113 = vmatprep.subr.mxu0 0.0
    %114 = vmatpush1.msra.mxu0 0.0
    %115 = vmatprep.subr.mxu0 0.0
    %116 = vmatpush1.msra.mxu0 0.0
    %117 = vmatprep.subr.mxu0 0.0
    %118 = vmatpush1.msra.mxu0 0.0
    %119 = vmatprep.subr.mxu0 0.0
    %120 = vmatpush1.msra.mxu0 0.0
    %121 = vmatprep.subr.mxu0 0.0
    %122 = vmatpush1.msra.mxu0 0.0
    %123 = vmatprep.subr.mxu0 0.0
    %124 = vmatpush1.msra.mxu0 0.0
    %125 = vmatprep.subr.mxu0 0.0
    %126 = vmatpush1.msra.mxu0 0.0
    %127 = vmatprep.subr.mxu0 0.0
    %128 = vmatpush1.msra.mxu0 0.0
    %129 = vmatprep.subr.mxu0 0.0
    %130 = vmatpush1.msra.mxu0 0.0
    %131 = vmatprep.subr.mxu0 0.0
    %132 = vmatpush1.msra.mxu0 0.0
    %133 = vmatprep.mubr.f32.mxu0 0.0
    %134 = vmatmul.mubr.f32.gmra.mrb[0].mxu0 1.0
    %v135 = vpop.f32.mrb[0].mxu0
    %v136 = vadd.f32 0.0, %v135
    %v137 = vpop.f32.mrb[0].mxu0
    %v138 = vadd.f32 0.0, %v137
    %139 = vdwg.mxu0
    %v142 = vcombine.low %v136, %v138
    %v144 = vunpack.c.l.s4 1966171168
    %v145 = vunpack.c.0.s8 %v144
    %v146 = vlaneseq
    %v147 = vshrl.u32 %v146, 7
    %v148 = vsub.s32 %v145, %v147
    %v149 = vrot.slane %v142, %v148
    %v151 = vunpack.c.l.s4 1966171168
    %v152 = vunpack.c.0.s8 %v151
    %v153 = vlaneseq
    %v154 = vshrl.u32 %v153, 7
    %v155 = vsub.s32 %v152, %v154
    %v156 = vrot.slane %v149, %v155
    %v158 = vadd.f32 %v68, %v156
    %v159 = vlaneseq
    %vm160 = vcmp.ge.s32.totalorder %v159, 0
    %vm161 = vcmp.lt.s32.totalorder %v159, 256
    %vm162 = vmand %vm160, %vm161
    %163 = vst.msk [vmem:[#allocation5] sm:$0x3] %vm162, %v158
    %v164 = vld [vmem:[#allocation6] sm:$0x3]
    %v165 = vmul.f32 %v36, %v36
    %v166 = vmul.f32 %v37, %v37
    %v167 = vmul.f32 %v38, %v38
    %v168 = vmul.f32 %v39, %v39
    %v169 = vmul.f32 %v40, %v40
    %v170 = vmul.f32 %v41, %v41
    %v171 = vmul.f32 %v42, %v42
    %v172 = vmul.f32 %v43, %v43
    %v173 = vmul.f32 %v44, %v44
    %v174 = vmul.f32 %v45, %v45
    %v175 = vmul.f32 %v46, %v46
    %v176 = vmul.f32 %v47, %v47
    %v177 = vmul.f32 %v48, %v48
    %v178 = vmul.f32 %v49, %v49
    %v179 = vmul.f32 %v50, %v50
    %v180 = vmul.f32 %v51, %v51
    %v181 = vmul.f32 %v52, %v52
    %v182 = vmul.f32 %v53, %v53
    %v183 = vmul.f32 %v54, %v54
    %v184 = vmul.f32 %v55, %v55
    %v185 = vmul.f32 %v56, %v56
    %v186 = vmul.f32 %v57, %v57
    %v187 = vmul.f32 %v58, %v58
    %v188 = vmul.f32 %v59, %v59
    %v189 = vmul.f32 %v60, %v60
    %v190 = vmul.f32 %v61, %v61
    %v191 = vmul.f32 %v62, %v62
    %v192 = vmul.f32 %v63, %v63
    %v193 = vmul.f32 %v64, %v64
    %v194 = vmul.f32 %v65, %v65
    %v195 = vmul.f32 %v66, %v66
    %v196 = vmul.f32 %v67, %v67
    %197 = vmatprep.subr.mxu0 %v166
    %198 = vmatpush1.msra.mxu0 %v165
    %199 = vmatprep.subr.mxu0 %v168
    %200 = vmatpush1.msra.mxu0 %v167
    %201 = vmatprep.subr.mxu0 %v170
    %202 = vmatpush1.msra.mxu0 %v169
    %203 = vmatprep.subr.mxu0 %v172
    %204 = vmatpush1.msra.mxu0 %v171
    %205 = vmatprep.subr.mxu0 %v174
    %206 = vmatpush1.msra.mxu0 %v173
    %207 = vmatprep.subr.mxu0 %v176
    %208 = vmatpush1.msra.mxu0 %v175
    %209 = vmatprep.subr.mxu0 %v178
    %210 = vmatpush1.msra.mxu0 %v177
    %211 = vmatprep.subr.mxu0 %v180
    %212 = vmatpush1.msra.mxu0 %v179
    %213 = vmatprep.subr.mxu0 %v182
    %214 = vmatpush1.msra.mxu0 %v181
    %215 = vmatprep.subr.mxu0 %v184
    %216 = vmatpush1.msra.mxu0 %v183
    %217 = vmatprep.subr.mxu0 %v186
    %218 = vmatpush1.msra.mxu0 %v185
    %219 = vmatprep.subr.mxu0 %v188
    %220 = vmatpush1.msra.mxu0 %v187
    %221 = vmatprep.subr.mxu0 %v190
    %222 = vmatpush1.msra.mxu0 %v189
    %223 = vmatprep.subr.mxu0 %v192
    %224 = vmatpush1.msra.mxu0 %v191
    %225 = vmatprep.subr.mxu0 %v194
    %226 = vmatpush1.msra.mxu0 %v193
    %227 = vmatprep.subr.mxu0 %v196
    %228 = vmatpush1.msra.mxu0 %v195
    %229 = vmatprep.subr.mxu0 0.0
    %230 = vmatpush1.msra.mxu0 0.0
    %231 = vmatprep.subr.mxu0 0.0
    %232 = vmatpush1.msra.mxu0 0.0
    %233 = vmatprep.subr.mxu0 0.0
    %234 = vmatpush1.msra.mxu0 0.0
    %235 = vmatprep.subr.mxu0 0.0
    %236 = vmatpush1.msra.mxu0 0.0
    %237 = vmatprep.subr.mxu0 0.0
    %238 = vmatpush1.msra.mxu0 0.0
    %239 = vmatprep.subr.mxu0 0.0
    %240 = vmatpush1.msra.mxu0 0.0
    %241 = vmatprep.subr.mxu0 0.0
    %242 = vmatpush1.msra.mxu0 0.0
    %243 = vmatprep.subr.mxu0 0.0
    %244 = vmatpush1.msra.mxu0 0.0
    %245 = vmatprep.subr.mxu0 0.0
    %246 = vmatpush1.msra.mxu0 0.0
    %247 = vmatprep.subr.mxu0 0.0
    %248 = vmatpush1.msra.mxu0 0.0
    %249 = vmatprep.subr.mxu0 0.0
    %250 = vmatpush1.msra.mxu0 0.0
    %251 = vmatprep.subr.mxu0 0.0
    %252 = vmatpush1.msra.mxu0 0.0
    %253 = vmatprep.subr.mxu0 0.0
    %254 = vmatpush1.msra.mxu0 0.0
    %255 = vmatprep.subr.mxu0 0.0
    %256 = vmatpush1.msra.mxu0 0.0
    %257 = vmatprep.subr.mxu0 0.0
    %258 = vmatpush1.msra.mxu0 0.0
    %259 = vmatprep.subr.mxu0 0.0
    %260 = vmatpush1.msra.mxu0 0.0
    %261 = vmatprep.mubr.f32.mxu0 0.0
    %262 = vmatmul.mubr.f32.gmra.mrb[0].mxu0 1.0
    %v263 = vpop.f32.mrb[0].mxu0
    %v264 = vadd.f32 0.0, %v263
    %v265 = vpop.f32.mrb[0].mxu0
    %v266 = vadd.f32 0.0, %v265
    %267 = vdwg.mxu0
    %v270 = vcombine.low %v264, %v266
    %v272 = vunpack.c.l.s4 1966171168
    %v273 = vunpack.c.0.s8 %v272
    %v274 = vlaneseq
    %v275 = vshrl.u32 %v274, 7
    %v276 = vsub.s32 %v273, %v275
    %v277 = vrot.slane %v270, %v276
    %v279 = vunpack.c.l.s4 1966171168
    %v280 = vunpack.c.0.s8 %v279
    %v281 = vlaneseq
    %v282 = vshrl.u32 %v281, 7
    %v283 = vsub.s32 %v280, %v282
    %v284 = vrot.slane %v277, %v283
    %v286 = vadd.f32 %v164, %v284
    %287 = vst.msk [vmem:[#allocation6] sm:$0x3] %vm162, %v286
    // Predicated region
    $region14: #{tpu_custom_call.1} parent=1 // pred_check
      %p288 = pneg %p26
    $region15: #{tpu_custom_call.1} parent=1 // pred_check_branch
      %290 = sbr.rel (%p288) target = $region17
    $region16: #{tpu_custom_call.1} parent=1 // pred_region
      %v291 = vld [vmem:[#allocation5] sm:$0x3]
      %v292 = vmul.f32 %v291, 0.0078125
      %v293 = vld [vmem:[#allocation6] sm:$0x3]
      %v294 = vmul.f32 %v293, 0.0078125
      %v295 = vmul.f32 %v292, %v292
      %v296 = vsub.f32 %v294, %v295
      %v297 = vmax.f32 %v296, 0.0
      %298 = vst.msk [vmem:[#allocation5] sm:$0x3] %vm162, %v292
      %v299 = vadd.f32 %v297, 1e-05
      %v300 = vrsqrt.pop %v299
      %301 = vst.msk [vmem:[#allocation6] sm:$0x3] %vm162, %v300
    $region17: #{tpu_custom_call.1} parent=1 // pred_fallthru
      _
    // Predicated region
    $region18: #{tpu_custom_call.1} parent=1 // pred_check
      _
    $region19: #{tpu_custom_call.1} parent=1 // pred_check_branch
      %303 = sbr.rel (0) target = $region21
    $region20: #{tpu_custom_call.1} parent=1 // pred_region
      %s305 = ssub.s32 32, 32
      %306 = vsyncadd [#allocation4], %s305
      %s308 = sshll.u32 [#allocation5], 4
      %s309 = int_to_ptr.vmem [resolvable:$true] %s308
      %311 = dma.vmem_to_hbm [thread:$0]  %s309, 32, %s1, [#allocation4]
    $region21: #{tpu_custom_call.1} parent=1 // pred_fallthru
      _
    // Predicated region
    $region22: #{tpu_custom_call.1} parent=1 // pred_check
      _
    $region23: #{tpu_custom_call.1} parent=1 // pred_check_branch
      %313 = sbr.rel (0) target = $region25
    $region24: #{tpu_custom_call.1} parent=1 // pred_region
      %s315 = ssub.s32 32, 32
      %316 = vsyncadd [#allocation7], %s315
      %s318 = sshll.u32 [#allocation6], 4
      %s319 = int_to_ptr.vmem [resolvable:$true] %s318
      %321 = dma.vmem_to_hbm [thread:$0]  %s319, 32, %s2, [#allocation7]
    $region25: #{tpu_custom_call.1} parent=1 // pred_fallthru
      _
    // Predicated region
    $region26: #{tpu_custom_call.1} parent=1 // pred_check
      _
    $region27: #{tpu_custom_call.1} parent=1 // pred_check_branch
      %323 = sbr.rel (0) target = $region29
    $region28: #{tpu_custom_call.1} parent=1 // pred_region
      %324 = dma.done [#allocation4], 32
    $region29: #{tpu_custom_call.1} parent=1 // pred_fallthru
      _
    // Predicated region
    $region30: #{tpu_custom_call.1} parent=1 // pred_check
      _
    $region31: #{tpu_custom_call.1} parent=1 // pred_check_branch
      %326 = sbr.rel (0) target = $region33
    $region32: #{tpu_custom_call.1} parent=1 // pred_region
      %327 = dma.done [#allocation7], 32
    $region33: #{tpu_custom_call.1} parent=1 // pred_fallthru
      _
    %328 = vsyncpa [#allocation3], 1
    %329 = vsyncpa [#allocation4], 1
    %330 = vsyncpa [#allocation7], 1

</llo_original>
